<compile_context>
chip_gen: v5e
topology: v5e:2x2
jax: 0.10.0
libtpu: 0.0.40
codegen_flags: <defaults>
</compile_context>

<pallas_src>
import functools
import math

import jax
import jax.numpy as jnp
from jax import lax
from jax.experimental import pallas as pl
from jax.experimental.pallas import tpu as pltpu


# Fuse the Wo projection into the attention epilogue when the (pre-cast) weight
# fits comfortably in VMEM alongside the resident K/V slabs.
_FUSE_WO_MAX_BYTES = 4 * 1024 * 1024


@functools.lru_cache(maxsize=None)
def _vmem_limit_bytes():
    """Generation-aware scoped-VMEM budget: ~96 MiB on 128 MiB parts (v5e/v6e),
    ~48 MiB on 64 MiB parts (v7x). Conservative fallback if the query fails."""
    cap = 64 * 1024 * 1024
    try:
        cap = int(pltpu.get_tpu_info().vmem_capacity_bytes)
    except Exception:
        pass
    return min(cap * 3 // 4, 100 * 1024 * 1024)


def _pick_tile(dim, candidates=(512, 256, 128)):
    """Largest candidate tile that evenly divides `dim`; else the full extent
    (a full-extent block is always legal w.r.t. the (8,128) constraint)."""
    for t in candidates:
        if dim >= t and dim % t == 0:
            return t
    return dim


# ----------------------------------------------------------------------------
# Kernel 1: dense linear layer  y = x @ W_t + b   (M/N/K tiled, f32 accumulator)
# ----------------------------------------------------------------------------
def _linear_kernel(x_ref, wt_ref, b_ref, o_ref, acc_ref, *, compute_dtype):
    @pl.when(pl.program_id(2) == 0)
    def _init():
        acc_ref[...] = jnp.zeros_like(acc_ref)

    acc_ref[...] += jnp.dot(x_ref[...].astype(compute_dtype),
                            wt_ref[...].astype(compute_dtype),
                            preferred_element_type=jnp.float32)

    @pl.when(pl.program_id(2) == pl.num_programs(2) - 1)
    def _finalize():
        o_ref[...] = (acc_ref[...] + b_ref[...]).astype(o_ref.dtype)


def pallas_linear(x2d, w_t, b, *, compute_dtype=jnp.float32, out_dtype=None):
    """x2d: (M, d_in); w_t: (d_in, d_out) pre-transposed; b: (d_out,)."""
    M, d_in = x2d.shape
    d_out = w_t.shape[1]
    out_dtype = compute_dtype if out_dtype is None else out_dtype

    tm = _pick_tile(M)
    tn = _pick_tile(d_out)
    tk = _pick_tile(d_in)
    nk = d_in // tk

    # Operand-aware grid order: the operand whose block index is constant along
    # the inner parallel axis stays resident; make that the larger one.
    weight_bytes = d_in * d_out * jnp.dtype(w_t.dtype).itemsize
    act_bytes = M * d_in * jnp.dtype(x2d.dtype).itemsize
    if weight_bytes > act_bytes:
        grid = (d_out // tn, M // tm, nk)
        x_map = lambda j, i, k: (i, k)
        w_map = lambda j, i, k: (k, j)
        b_map = lambda j, i, k: (0, j)
        o_map = lambda j, i, k: (i, j)
    else:
        grid = (M // tm, d_out // tn, nk)
        x_map = lambda i, j, k: (i, k)
        w_map = lambda i, j, k: (k, j)
        b_map = lambda i, j, k: (0, j)
        o_map = lambda i, j, k: (i, j)

    kernel = functools.partial(_linear_kernel, compute_dtype=compute_dtype)
    flops = 2 * M * d_in * d_out
    bytes_accessed = int(act_bytes + weight_bytes
                         + M * d_out * jnp.dtype(out_dtype).itemsize
                         + 4 * d_out)

    return pl.pallas_call(
        kernel,
        out_shape=jax.ShapeDtypeStruct((M, d_out), out_dtype),
        grid=grid,
        in_specs=[
            pl.BlockSpec((tm, tk), x_map),
            pl.BlockSpec((tk, tn), w_map),
            pl.BlockSpec((1, tn), b_map),
        ],
        out_specs=pl.BlockSpec((tm, tn), o_map),
        scratch_shapes=[pltpu.VMEM((tm, tn), jnp.float32)],
        compiler_params=pltpu.CompilerParams(
            dimension_semantics=("parallel", "parallel", "arbitrary"),
            vmem_limit_bytes=_vmem_limit_bytes(),
        ),
        cost_estimate=pl.CostEstimate(
            flops=flops, transcendentals=0, bytes_accessed=bytes_accessed),
    )(x2d, w_t, b.reshape(1, d_out))


# ----------------------------------------------------------------------------
# Kernel 2: multi-head scaled-dot-product attention (heads on lanes),
#           optionally fused with the final Wo projection.
# ----------------------------------------------------------------------------
def _mha_attention_kernel(*refs, h, d_k, compute_dtype, has_mask, fuse_wo):
    idx = 0
    if has_mask:
        mask_ref = refs[idx]; idx += 1
    q_ref, k_ref, v_ref = refs[idx], refs[idx + 1], refs[idx + 2]; idx += 3
    if fuse_wo:
        wo_ref, bo_ref = refs[idx], refs[idx + 1]; idx += 2
    o_ref = refs[idx]; idx += 1
    ctx_ref = refs[idx]                       # (tq, d_model) VMEM scratch

    approx = jnp.dtype(compute_dtype) != jnp.dtype(jnp.float32)
    q = q_ref[0]                              # (tq, d_model), heads on lanes
    k = k_ref[0]                              # (Sk, d_model)
    v = v_ref[0]                              # (Sk, d_model)

    if has_mask:
        m = mask_ref[0]                       # (1, Sk)
        # Additive bias, computed ONCE per tile (not per head).
        bias = jnp.where(m == 0, jnp.float32(-1e9), jnp.float32(0.0))

    # NOTE: the 1/sqrt(d_k) score scale is already folded into Wq/bq.
    for hh in range(h):                       # static unroll; one head live at a time
        lo = hh * d_k
        q_h = q[:, lo:lo + d_k].astype(compute_dtype)
        k_h = k[:, lo:lo + d_k].astype(compute_dtype)
        v_h = v[:, lo:lo + d_k].astype(compute_dtype)

        # NT contraction feeds the MXU directly (no per-head transpose).
        s = lax.dot_general(q_h, k_h,
                            dimension_numbers=(((1,), (1,)), ((), ())),
                            preferred_element_type=jnp.float32)   # (tq, Sk)
        if has_mask:
            s = s + bias

        row_max = jnp.max(s, axis=-1, keepdims=True)              # stable softmax
        e = jnp.exp(s - row_max)
        denom = jnp.sum(e, axis=-1, keepdims=True)

        ctx_h = jnp.dot(e.astype(compute_dtype), v_h,
                        preferred_element_type=jnp.float32)       # (tq, d_k)
        # Normalize AFTER the PV matmul: (tq,d_k) multiply instead of (tq,Sk).
        ctx_h = ctx_h * pl.reciprocal(denom, approx=bool(approx))
        ctx_ref[:, lo:lo + d_k] = ctx_h.astype(ctx_ref.dtype)

    ctx = ctx_ref[...]
    if fuse_wo:
        out = jnp.dot(ctx.astype(compute_dtype),
                      wo_ref[...].astype(compute_dtype),
                      preferred_element_type=jnp.float32)
        o_ref[0] = (out + bo_ref[...]).astype(o_ref.dtype)
    else:
        o_ref[0] = ctx.astype(o_ref.dtype)


def pallas_attention(q, k, v, mask3, h, *, compute_dtype=jnp.float32,
                     wo_t=None, bo=None, out_dtype=None):
    """q: (B, Sq, d_model); k, v: (B, Sk, d_model); mask3: (B, 1, Sk) or None.
    If wo_t/bo are given, the output is the fused Wo projection; otherwise the
    concatenated per-head context. Returns (B, Sq, d_model)."""
    B, Sq, d_model = q.shape
    Sk = k.shape[1]
    d_k = d_model // h
    tq = _pick_tile(Sq)
    grid = (B, Sq // tq)

    has_mask = mask3 is not None
    fuse_wo = wo_t is not None
    if out_dtype is None:
        out_dtype = jnp.float32 if fuse_wo else compute_dtype

    kernel = functools.partial(_mha_attention_kernel, h=h, d_k=d_k,
                               compute_dtype=compute_dtype,
                               has_mask=has_mask, fuse_wo=fuse_wo)

    inputs, in_specs = [], []
    if has_mask:
        inputs.append(mask3)
        in_specs.append(pl.BlockSpec((1, 1, Sk), lambda b, i: (b, 0, 0)))
    inputs += [q, k, v]
    in_specs += [
        pl.BlockSpec((1, tq, d_model), lambda b, i: (b, i, 0)),
        pl.BlockSpec((1, Sk, d_model), lambda b, i: (b, 0, 0)),
        pl.BlockSpec((1, Sk, d_model), lambda b, i: (b, 0, 0)),
    ]
    if fuse_wo:
        inputs += [wo_t, bo.reshape(1, d_model)]
        in_specs += [
            pl.BlockSpec((d_model, d_model), lambda b, i: (0, 0)),
            pl.BlockSpec((1, d_model), lambda b, i: (0, 0)),
        ]

    itemsize = jnp.dtype(compute_dtype).itemsize
    flops = 4 * B * Sq * Sk * d_model
    if fuse_wo:
        flops += 2 * B * Sq * d_model * d_model
    transcend = B * h * Sq * Sk
    bytes_accessed = int(itemsize * (B * Sq * d_model + 2 * B * Sk * d_model)
                         + jnp.dtype(out_dtype).itemsize * B * Sq * d_model
                         + (4 * B * Sk if has_mask else 0)
                         + (itemsize * d_model * d_model if fuse_wo else 0))

    return pl.pallas_call(
        kernel,
        out_shape=jax.ShapeDtypeStruct((B, Sq, d_model), out_dtype),
        grid=grid,
        in_specs=in_specs,
        out_specs=pl.BlockSpec((1, tq, d_model), lambda b, i: (b, i, 0)),
        scratch_shapes=[pltpu.VMEM((tq, d_model), compute_dtype)],
        compiler_params=pltpu.CompilerParams(
            dimension_semantics=("parallel", "parallel"),
            vmem_limit_bytes=_vmem_limit_bytes(),
        ),
        cost_estimate=pl.CostEstimate(
            flops=flops, transcendentals=transcend,
            bytes_accessed=bytes_accessed),
    )(*inputs)


# ----------------------------------------------------------------------------
# MultiHeadedAttention forward (glue in plain JAX, compute in Pallas)
# ----------------------------------------------------------------------------
def prepare_params(raw):
    """One-time weight prep:
      * torch-style (d_out, d_in) weights pre-transposed to (d_in, d_out),
      * the 1/sqrt(d_k) softmax scale folded into Wq/bq (so the kernel never
        multiplies the (tq,Sk) score tile by the scale),
      * Q/K/V projections fused for the self-attention path."""
    h = raw["h"]
    d_model = raw["wq"].shape[0]
    d_k = d_model // h
    scale = 1.0 / math.sqrt(d_k)

    wq = raw["wq"] * scale
    bq = raw["bq"] * scale

    p = {"h": h}
    p["wq_t"], p["wk_t"] = wq.T, raw["wk"].T
    p["wv_t"], p["wo_t"] = raw["wv"].T, raw["wo"].T
    p["bq"], p["bk"], p["bv"], p["bo"] = bq, raw["bk"], raw["bv"], raw["bo"]
    p["w_qkv_t"] = jnp.concatenate([wq, raw["wk"], raw["wv"]], axis=0).T
    p["b_qkv"] = jnp.concatenate([bq, raw["bk"], raw["bv"]])
    return p


def multi_headed_attention(params, query, key, value, mask=None,
                           compute_dtype=jnp.float32, fuse_wo=None):
    """query: (B, Sq, d_model); key/value: (B, Sk, d_model); mask: (B, 1, Sk) or None.
    Returns (B, Sq, d_model) f32 -- same as the PyTorch module's forward().
    compute_dtype=jnp.bfloat16 uses the bf16 MXU path (f32 accumulation)."""
    B, Sq, d_model = query.shape
    Sk = key.shape[1]
    h = params["h"]

    if fuse_wo is None:
        fuse_wo = (d_model * d_model * jnp.dtype(compute_dtype).itemsize
                   <= _FUSE_WO_MAX_BYTES)

    if (query is key) and (key is value):
        # Self-attention: fused QKV projection (one activation read, one MXU pass).
        qkv = pallas_linear(query.reshape(B * Sq, d_model), params["w_qkv_t"],
                            params["b_qkv"], compute_dtype=compute_dtype,
                            out_dtype=compute_dtype)
        q, k, v = jnp.split(qkv, 3, axis=-1)
        q = q.reshape(B, Sq, d_model)
        k = k.reshape(B, Sq, d_model)
        v = v.reshape(B, Sq, d_model)
    else:
        q = pallas_linear(query.reshape(B * Sq, d_model), params["wq_t"],
                          params["bq"], compute_dtype=compute_dtype,
                          out_dtype=compute_dtype).reshape(B, Sq, d_model)
        k = pallas_linear(key.reshape(B * Sk, d_model), params["wk_t"],
                          params["bk"], compute_dtype=compute_dtype,
                          out_dtype=compute_dtype).reshape(B, Sk, d_model)
        v = pallas_linear(value.reshape(B * Sk, d_model), params["wv_t"],
                          params["bv"], compute_dtype=compute_dtype,
                          out_dtype=compute_dtype).reshape(B, Sk, d_model)

    if fuse_wo:
        # Attention + Wo fused: the (B,Sq,d_model) context never round-trips HBM.
        wo_c = params["wo_t"].astype(compute_dtype)   # one-time cast per call
        return pallas_attention(q, k, v, mask, h, compute_dtype=compute_dtype,
                                wo_t=wo_c, bo=params["bo"],
                                out_dtype=jnp.float32)

    ctx = pallas_attention(q, k, v, mask, h, compute_dtype=compute_dtype)
    out = pallas_linear(ctx.reshape(B * Sq, d_model), params["wo_t"],
                        params["bo"], compute_dtype=compute_dtype,
                        out_dtype=jnp.float32)
    return out.reshape(B, Sq, d_model)


# ----------------------------------------------------------------------------
# Pure-JAX reference (for correctness check)
# ----------------------------------------------------------------------------
def reference(raw, query, key, value, mask):
    h = raw["h"]
    B, Sq, d_model = query.shape
    d_k = d_model // h

    def lin(x, w, b):
        return x @ w.T + b

    def split(x):
        b_, s_, _ = x.shape
        return x.reshape(b_, s_, h, d_k).transpose(0, 2, 1, 3)

    q = split(lin(query, raw["wq"], raw["bq"]))
    k = split(lin(key, raw["wk"], raw["bk"]))
    v = split(lin(value, raw["wv"], raw["bv"]))

    scores = jnp.einsum("bhqd,bhkd->bhqk", q, k) / math.sqrt(d_k)
    m4 = mask[:, None]                                          # (B,1,1,Sk)
    scores = jnp.where(m4 == 0, -1e9, scores)
    p = jax.nn.softmax(scores, axis=-1)
    x = jnp.einsum("bhqk,bhkd->bhqd", p, v)
    x = x.transpose(0, 2, 1, 3).reshape(B, Sq, d_model)
    return lin(x, raw["wo"], raw["bo"])


# ----------------------------------------------------------------------------
if __name__ == "__main__":
    B, S, d_model, h = 2, 8, 32, 4

    key0 = jax.random.PRNGKey(0)
    ks = jax.random.split(key0, 12)
    scale = 1.0 / math.sqrt(d_model)

    raw = {
        "h": h,
        "wq": jax.random.normal(ks[0], (d_model, d_model), jnp.float32) * scale,
        "bq": jax.random.normal(ks[1], (d_model,), jnp.float32) * 0.01,
        "wk": jax.random.normal(ks[2], (d_model, d_model), jnp.float32) * scale,
        "bk": jax.random.normal(ks[3], (d_model,), jnp.float32) * 0.01,
        "wv": jax.random.normal(ks[4], (d_model, d_model), jnp.float32) * scale,
        "bv": jax.random.normal(ks[5], (d_model,), jnp.float32) * 0.01,
        "wo": jax.random.normal(ks[6], (d_model, d_model), jnp.float32) * scale,
        "bo": jax.random.normal(ks[7], (d_model,), jnp.float32) * 0.01,
    }
    params = prepare_params(raw)

    x = jax.random.normal(ks[8], (B, S, d_model), jnp.float32)
    keyx = jax.random.normal(ks[9], (B, S, d_model), jnp.float32)
    value = jax.random.normal(ks[10], (B, S, d_model), jnp.float32)

    # padding mask: last 2 positions of batch 1 are padding
    mask = jnp.ones((B, 1, S), dtype=jnp.int32)
    mask = mask.at[1, 0, -2:].set(0)

    # 1) self-attention (fused QKV + fused Wo epilogue), f32 compute
    out_self = jax.block_until_ready(multi_headed_attention(params, x, x, x, mask))
    ref_self = reference(raw, x, x, x, mask)
    assert jnp.allclose(out_self, ref_self, atol=1e-4, rtol=1e-4), (
        f"self-attn max err {jnp.max(jnp.abs(out_self - ref_self))}"
    )

    # 2) cross-attention (separate projections), f32 compute
    out_cross = jax.block_until_ready(
        multi_headed_attention(params, x, keyx, value, mask))
    ref_cross = reference(raw, x, keyx, value, mask)
    assert jnp.allclose(out_cross, ref_cross, atol=1e-4, rtol=1e-4), (
        f"cross-attn max err {jnp.max(jnp.abs(out_cross - ref_cross))}"
    )

    # 3) bf16 MXU-input fast path (v6e/v7x), f32 accumulation, looser tolerance
    out_bf16 = jax.block_until_ready(
        multi_headed_attention(params, x, x, x, mask, compute_dtype=jnp.bfloat16))
    assert jnp.allclose(out_bf16, ref_self, atol=5e-2, rtol=5e-2), (
        f"bf16 max err {jnp.max(jnp.abs(out_bf16 - ref_self))}"
    )

    # 4) unfused-Wo fallback path (used when d_model^2 is too big for VMEM)
    out_unfused = jax.block_until_ready(
        multi_headed_attention(params, x, x, x, mask, fuse_wo=False))
    assert jnp.allclose(out_unfused, ref_self, atol=1e-4, rtol=1e-4), (
        f"unfused-Wo max err {jnp.max(jnp.abs(out_unfused - ref_self))}"
    )

    print("KERNEL_OK")
</pallas_src>

<mosaic_0001>
module attributes {stable_mosaic.version = 11 : i64} {
  func.func @_linear_kernel(%arg0: i32, %arg1: i32, %arg2: i32, %arg3: memref<16x32xf32, #tpu.memory_space<vmem>>, %arg4: memref<32x96xf32, #tpu.memory_space<vmem>>, %arg5: memref<1x96xf32, #tpu.memory_space<vmem>>, %arg6: memref<16x96xf32, #tpu.memory_space<vmem>>, %arg7: memref<16x96xf32, #tpu.memory_space<vmem>>) attributes {dimension_semantics = [#tpu.dimension_semantics<parallel>, #tpu.dimension_semantics<parallel>, #tpu.dimension_semantics<arbitrary>], iteration_bounds = array<i64: 1, 1, 1>, scalar_prefetch = 0 : i64, scratch_operands = 1 : i64, tpu.core_type = #tpu.core_type<tc>, window_params = [{transform_indices = @transform_0, window_bounds = array<i64: 16, 32>}, {transform_indices = @transform_1, window_bounds = array<i64: 32, 96>}, {transform_indices = @transform_2, window_bounds = array<i64: 1, 96>}, {transform_indices = @transform_3, window_bounds = array<i64: 16, 96>}]} {
    %c0_i32 = arith.constant 0 : i32
    %0 = arith.cmpi eq, %arg2, %c0_i32 : i32
    %1 = arith.extui %0 : i1 to i32
    %c0_i32_0 = arith.constant 0 : i32
    %2 = arith.cmpi ne, %1, %c0_i32_0 : i32
    scf.if %2 {
      %cst_10 = arith.constant 0.000000e+00 : f32
      %12 = vector.broadcast %cst_10 : f32 to vector<16x96xf32>
      %c0_11 = arith.constant 0 : index
      %c0_12 = arith.constant 0 : index
      %13 = vector.load %arg7[%c0_11, %c0_12] : memref<16x96xf32, #tpu.memory_space<vmem>>, vector<16x96xf32>
      tpu.vector_store %arg7[%c0_11, %c0_12], %12 {strides = array<i32>} : memref<16x96xf32, #tpu.memory_space<vmem>>, vector<16x96xf32>,
    } else {
    }
    %c0 = arith.constant 0 : index
    %c0_1 = arith.constant 0 : index
    %3 = vector.load %arg7[%c0, %c0_1] : memref<16x96xf32, #tpu.memory_space<vmem>>, vector<16x96xf32>
    %c0_2 = arith.constant 0 : index
    %c0_3 = arith.constant 0 : index
    %4 = vector.load %arg3[%c0_2, %c0_3] : memref<16x32xf32, #tpu.memory_space<vmem>>, vector<16x32xf32>
    %c0_4 = arith.constant 0 : index
    %c0_5 = arith.constant 0 : index
    %5 = vector.load %arg4[%c0_4, %c0_5] : memref<32x96xf32, #tpu.memory_space<vmem>>, vector<32x96xf32>
    %cst = arith.constant dense<0.000000e+00> : vector<16x96xf32>
    %6 = tpu.matmul %4, %5, %cst {dimension_numbers = #tpu.dot_dimension_numbers<[1], [0], [0], [1], [0, 0, 1, 1], [], []>} : vector<16x32xf32>, vector<32x96xf32>, vector<16x96xf32> -> vector<16x96xf32>
    %7 = arith.addf %3, %6 : vector<16x96xf32>
    %c0_6 = arith.constant 0 : index
    %c0_7 = arith.constant 0 : index
    %8 = vector.load %arg7[%c0_6, %c0_7] : memref<16x96xf32, #tpu.memory_space<vmem>>, vector<16x96xf32>
    tpu.vector_store %arg7[%c0_6, %c0_7], %7 {strides = array<i32>} : memref<16x96xf32, #tpu.memory_space<vmem>>, vector<16x96xf32>,
    %c0_i32_8 = arith.constant 0 : i32
    %9 = arith.cmpi eq, %arg2, %c0_i32_8 : i32
    %10 = arith.extui %9 : i1 to i32
    %c0_i32_9 = arith.constant 0 : i32
    %11 = arith.cmpi ne, %10, %c0_i32_9 : i32
    scf.if %11 {
      %c0_10 = arith.constant 0 : index
      %c0_11 = arith.constant 0 : index
      %12 = vector.load %arg7[%c0_10, %c0_11] : memref<16x96xf32, #tpu.memory_space<vmem>>, vector<16x96xf32>
      %c0_12 = arith.constant 0 : index
      %c0_13 = arith.constant 0 : index
      %13 = vector.load %arg5[%c0_12, %c0_13] : memref<1x96xf32, #tpu.memory_space<vmem>>, vector<1x96xf32>
      %14 = vector.broadcast %13 : vector<1x96xf32> to vector<16x96xf32>
      %15 = arith.addf %12, %14 : vector<16x96xf32>
      %c0_14 = arith.constant 0 : index
      %c0_15 = arith.constant 0 : index
      %16 = vector.load %arg6[%c0_14, %c0_15] : memref<16x96xf32, #tpu.memory_space<vmem>>, vector<16x96xf32>
      tpu.vector_store %arg6[%c0_14, %c0_15], %15 {strides = array<i32>} : memref<16x96xf32, #tpu.memory_space<vmem>>, vector<16x96xf32>,
    } else {
    }
    return
  }
  func.func @transform_0(%arg0: i32, %arg1: i32, %arg2: i32) -> (i32, i32) {
    %c0_i32 = arith.constant 0 : i32
    return %arg1, %arg2 : i32, i32
  }
  func.func @transform_1(%arg0: i32, %arg1: i32, %arg2: i32) -> (i32, i32) {
    %c0_i32 = arith.constant 0 : i32
    return %arg2, %arg0 : i32, i32
  }
  func.func @transform_2(%arg0: i32, %arg1: i32, %arg2: i32) -> (i32, i32) {
    %c0_i32 = arith.constant 0 : i32
    %c0_i32_0 = arith.constant 0 : i32
    return %c0_i32, %arg0 : i32, i32
  }
  func.func @transform_3(%arg0: i32, %arg1: i32, %arg2: i32) -> (i32, i32) {
    %c0_i32 = arith.constant 0 : i32
    return %arg1, %arg0 : i32, i32
  }
}

</mosaic_0001>

<llo_original>
// kernel: tpu_custom_call.1
$region0: #{tpu_custom_call.1}
  #allocation0 [shape = 'u32[]', space=smem, size = 0x4, offset = 0x4, fixed_abs, tag = 'smem constant byte address 0x4 - core index']
  #allocation1 [shape = 'u32[72,128]{1,0:T(1,128)}', space=vmem, size = 0x9000, scoped, tag = 'internal scratch']
  #allocation2 [shape = 'f32[16,96]{1,0:T(8,128)}', space=vmem, size = 0x2000, scoped, tag = 'scratch operand']
  %s0 = inlined_call_operand.hbm [shape: f32[16,32], index: 0, kind: input, shape index: {}]
  %s1 = inlined_call_operand.hbm [shape: f32[32,96], index: 1, kind: input, shape index: {}]
  %s2 = inlined_call_operand.vmem [shape: f32[1,96], index: 2, kind: input, shape index: {}]
  %s3 = inlined_call_operand.hbm [shape: f32[16,96], index: 3, kind: output, shape index: {}]
  %s4 = sld [smem:[#allocation0]]
  $region38: #{tpu_custom_call.1} parent=0
    _
  %s6 = ssub.s32 1, %s4
  %s7 = scalar_select 0, %s6, %s4
  $region1: #{tpu_custom_call.1} parent=0
    #allocation3 [shape = 'u8[8192]{0}', space=vmem, size = 0x2000, scoped, tag = 'input window, operand 0, single buffered']
    #allocation4 [shape = 's32[1]{0}', space=sflag, size = 0x4, scoped, tag = 'scoped memory for tpu_custom_call.1']
    #allocation5 [shape = 's32[1]{0}', space=sflag, size = 0x4, scoped, tag = 'scoped memory for tpu_custom_call.1']
    #allocation6 [shape = 'u8[16384]{0}', space=vmem, size = 0x4000, scoped, tag = 'input window, operand 1, single buffered']
    #allocation7 [shape = 's32[1]{0}', space=sflag, size = 0x4, scoped, tag = 'scoped memory for tpu_custom_call.1']
    #allocation8 [shape = 'u8[8192]{0}', space=vmem, size = 0x2000, scoped, tag = 'output window, operand 0, single buffered']
    %8 = vsyncpa [#allocation4], 0
    %9 = vsyncpa [#allocation7], 0
    %10 = vsyncpa [#allocation5], 0
    // Predicated region
    $region2: #{tpu_custom_call.1} parent=1 // pred_check
      _
    $region3: #{tpu_custom_call.1} parent=1 // pred_check_branch
      %12 = sbr.rel (0) target = $region5
    $region4: #{tpu_custom_call.1} parent=1 // pred_region
      %14 = vsyncadd [#allocation4], 0
      %s15 = sshll.u32 %s0, 4
      %s16 = int_to_ptr.hbm [resolvable:$true] %s15
      %s17 = sshll.u32 [#allocation3], 4
      %s18 = int_to_ptr.vmem [resolvable:$true] %s17
      %23 = dma.hbm_to_vmem [thread:$0]  %s16, 256, %s18, [#allocation4], 128, 128, 8
    $region5: #{tpu_custom_call.1} parent=1 // pred_fallthru
      _
    // Predicated region
    $region6: #{tpu_custom_call.1} parent=1 // pred_check
      _
    $region7: #{tpu_custom_call.1} parent=1 // pred_check_branch
      %25 = sbr.rel (0) target = $region9
    $region8: #{tpu_custom_call.1} parent=1 // pred_region
      %27 = vsyncadd [#allocation7], 0
      %s28 = sshll.u32 %s1, 4
      %s29 = int_to_ptr.hbm [resolvable:$true] %s28
      %s30 = sshll.u32 [#allocation6], 4
      %s31 = int_to_ptr.vmem [resolvable:$true] %s30
      %36 = dma.hbm_to_vmem [thread:$0]  %s29, 512, %s31, [#allocation7], 128, 128, 8
    $region9: #{tpu_custom_call.1} parent=1 // pred_fallthru
      _
    // Predicated region
    $region10: #{tpu_custom_call.1} parent=1 // pred_check
      _
    $region11: #{tpu_custom_call.1} parent=1 // pred_check_branch
      %38 = sbr.rel (0) target = $region13
    $region12: #{tpu_custom_call.1} parent=1 // pred_region
      _
    $region13: #{tpu_custom_call.1} parent=1 // pred_fallthru
      _
    // Predicated region
    $region14: #{tpu_custom_call.1} parent=1 // pred_check
      _
    $region15: #{tpu_custom_call.1} parent=1 // pred_check_branch
      %40 = sbr.rel (0) target = $region17
    $region16: #{tpu_custom_call.1} parent=1 // pred_region
      %42 = dma.done [#allocation4], 256
    $region17: #{tpu_custom_call.1} parent=1 // pred_fallthru
      _
    // Predicated region
    $region18: #{tpu_custom_call.1} parent=1 // pred_check
      _
    $region19: #{tpu_custom_call.1} parent=1 // pred_check_branch
      %44 = sbr.rel (0) target = $region21
    $region20: #{tpu_custom_call.1} parent=1 // pred_region
      %46 = dma.done [#allocation7], 512
    $region21: #{tpu_custom_call.1} parent=1 // pred_fallthru
      _
    %p47 = scmp.eq.s32.totalorder 0, 0
    // Predicated region
    $region22: #{tpu_custom_call.1} parent=1 // pred_check
      %p48 = pneg %p47
    $region23: #{tpu_custom_call.1} parent=1 // pred_check_branch
      %50 = sbr.rel (%p48) target = $region25
    $region24: #{tpu_custom_call.1} parent=1 // pred_region
      %vm51 = vcmask 785408
      %52 = vst.msk [vmem:[#allocation2] sm:$0xff] %vm51, 0.0
      %53 = vst.msk [vmem:[#allocation2 + $0x8] sm:$0xff] %vm51, 0.0
    $region25: #{tpu_custom_call.1} parent=1 // pred_fallthru
      _
    %v54 = vld [vmem:[#allocation2] sm:$0xff]
    %v55 = vld [vmem:[#allocation2 + $0x8] sm:$0xff]
    %v56 = vld [vmem:[#allocation3] sm:$0xff]
    %v57 = vld [vmem:[#allocation3 + $0x8] sm:$0xff]
    %v58 = vld [vmem:[#allocation6] sm:$0xff]
    %v59 = vld [vmem:[#allocation6 + $0x8] sm:$0xff]
    %v60 = vld [vmem:[#allocation6 + $0x10] sm:$0xff]
    %v61 = vld [vmem:[#allocation6 + $0x18] sm:$0xff]
    %vm62 = vcmask 261120
    %v64 = vsel %vm62, %v56, 0
    %v67 = vsel %vm62, %v57, 0
    %69 = vmatpush.msra.mxu0 0.0
    %70 = vmatpush.msra.mxu0 0.0
    %71 = vmatpush.msra.mxu0 0.0
    %72 = vmatpush.msra.mxu0 0.0
    %73 = vmatpush.msra.mxu0 0.0
    %74 = vmatpush.msra.mxu0 0.0
    %75 = vmatpush.msra.mxu0 0.0
    %76 = vmatpush.msra.mxu0 0.0
    %77 = vmatpush.msra.mxu0 0.0
    %78 = vmatpush.msra.mxu0 0.0
    %79 = vmatpush.msra.mxu0 0.0
    %80 = vmatpush.msra.mxu0 0.0
    %81 = vmatpush.msra.mxu0 %v61
    %82 = vmatpush.msra.mxu0 %v60
    %83 = vmatpush.msra.mxu0 %v59
    %84 = vmatpush.msra.mxu0 %v58
    %85 = vmatmul.f32.gmra.mxu0 %v64
    %v86 = vpop.f32.mrf.mxu0
    %v87 = vadd.f32 0.0, %v86
    %88 = vmatmul.f32.gmra.mxu0 %v67
    %v89 = vpop.f32.mrf.mxu0
    %v90 = vadd.f32 0.0, %v89
    %91 = vdwg.mxu0
    %v92 = vadd.f32 %v54, %v87
    %v93 = vadd.f32 %v55, %v90
    %vm94 = vcmask 785408
    %95 = vst.msk [vmem:[#allocation2] sm:$0xff] %vm94, %v92
    %96 = vst.msk [vmem:[#allocation2 + $0x8] sm:$0xff] %vm94, %v93
    // Predicated region
    $region26: #{tpu_custom_call.1} parent=1 // pred_check
      %p97 = pneg %p47
    $region27: #{tpu_custom_call.1} parent=1 // pred_check_branch
      %99 = sbr.rel (%p97) target = $region29
    $region28: #{tpu_custom_call.1} parent=1 // pred_region
      %v100 = vld [vmem:[#allocation2] sm:$0xff]
      %v101 = vld [vmem:[#allocation2 + $0x8] sm:$0xff]
      %v102 = vld [vmem:[%s2] sm:$0x1]
      %v104 = vperm.slane %v102, 0
      %v106 = vadd.f32 %v100, %v104
      %v107 = vadd.f32 %v101, %v104
      %108 = vst.msk [vmem:[#allocation8] sm:$0xff] %vm94, %v106
      %109 = vst.msk [vmem:[#allocation8 + $0x8] sm:$0xff] %vm94, %v107
    $region29: #{tpu_custom_call.1} parent=1 // pred_fallthru
      _
    // Predicated region
    $region30: #{tpu_custom_call.1} parent=1 // pred_check
      _
    $region31: #{tpu_custom_call.1} parent=1 // pred_check_branch
      %111 = sbr.rel (0) target = $region33
    $region32: #{tpu_custom_call.1} parent=1 // pred_region
      %113 = vsyncadd [#allocation5], 0
      %s114 = sshll.u32 [#allocation8], 4
      %s115 = int_to_ptr.vmem [resolvable:$true] %s114
      %s116 = sshll.u32 %s3, 4
      %s117 = int_to_ptr.hbm [resolvable:$true] %s116
      %122 = dma.vmem_to_hbm [thread:$0]  %s115, 256, %s117, [#allocation5], 128, 128, 8
    $region33: #{tpu_custom_call.1} parent=1 // pred_fallthru
      _
    // Predicated region
    $region34: #{tpu_custom_call.1} parent=1 // pred_check
      _
    $region35: #{tpu_custom_call.1} parent=1 // pred_check_branch
      %124 = sbr.rel (0) target = $region37
    $region36: #{tpu_custom_call.1} parent=1 // pred_region
      %126 = dma.done [#allocation5], 256
    $region37: #{tpu_custom_call.1} parent=1 // pred_fallthru
      _
    %127 = vsyncpa [#allocation4], 1
    %128 = vsyncpa [#allocation7], 1
    %129 = vsyncpa [#allocation5], 1

</llo_original>
